<compile_context>
chip_gen: v7x
topology: tpu7x:2x2x1
jax: 0.10.0
libtpu: 0.0.40
codegen_flags: <defaults>
</compile_context>

<pallas_src>
import functools

import jax
import jax.numpy as jnp
import numpy as np
from jax import lax
from jax.experimental import pallas as pl
from jax.experimental.pallas import tpu as pltpu

_LANE = 128


def _bin_ths_kernel(s_ref, o_ref,
                    probs_ref, labels_ref, mask_ref, psum_ref, pcnt_ref,
                    *, pos_ths, neg_ths, enable_sigmoid, n, block_rows,
                    padded_total):
    s = s_ref[...].astype(jnp.float32)          # (block_rows, 128) logits
    o = o_ref[...].astype(jnp.float32)          # (block_rows, 128) overlaps

    pos = o > pos_ths
    labels = jnp.where(pos, 1.0, 0.0)           # f32 0/1
    sel = jnp.logical_or(pos, o <= neg_ths)     # module's selection mask

    if padded_total != n:
        # Ragged tail: the last grid step may cover rows/cols past the real
        # data (unspecified VMEM contents). Exclude them by flat index so pad
        # or garbage values never enter the mean.
        i = pl.program_id(0)
        row = lax.broadcasted_iota(jnp.int32, s.shape, 0)
        col = lax.broadcasted_iota(jnp.int32, s.shape, 1)
        flat = (i * block_rows + row) * _LANE + col
        msk = jnp.logical_and(sel, flat < n)
    else:
        msk = sel

    # BCEWithLogits (stable form), sharing a single exp per element:
    #   bce = max(s, 0) - s*y + log1p(exp(-|s|))
    e = jnp.exp(-jnp.abs(s))
    bce = jnp.maximum(s, 0.0) - s * labels + jnp.log1p(e)

    maskf = jnp.where(msk, 1.0, 0.0)
    psum_ref[...] = jnp.sum(jnp.where(msk, bce, 0.0), axis=0,
                            keepdims=True).reshape(1, 1, _LANE)
    pcnt_ref[...] = jnp.sum(maskf, axis=0, keepdims=True).reshape(1, 1, _LANE)

    if enable_sigmoid:
        # sigmoid(s) from the same e = exp(-|s|):
        #   s >= 0 -> 1/(1+e),  s < 0 -> e/(1+e)
        probs = jnp.where(s >= 0.0, 1.0, e) * pl.reciprocal(1.0 + e)
    else:
        probs = jnp.clip(s, 0.0, 1.0)

    probs_ref[...] = probs.astype(probs_ref.dtype)
    labels_ref[...] = labels.astype(labels_ref.dtype)   # int8 0/1
    mask_ref[...] = maskf.astype(mask_ref.dtype)        # int8 0/1


@functools.partial(jax.jit, static_argnames=(
    "overlap_pos_ths", "overlap_neg_ths", "enable_sigmoid", "block_rows"))
def bin_ths_overlap_loss(scores, overlap, overlap_pos_ths=0.5,
                         overlap_neg_ths=0.0, enable_sigmoid=True,
                         block_rows=1024):
    """Returns (loss, probs[n], labels_int8[n], mask_int8[n])."""
    s = scores.reshape(-1)
    o = overlap.reshape(-1)
    n = s.shape[0]

    rem = n % _LANE
    if rem:
        # TODO(synk): a 1-D block layout could avoid this single pad copy for
        # non-multiple-of-128 flat sizes; kept 2-D (rows,128) for layout safety.
        s = jnp.pad(s, (0, _LANE - rem))
        o = jnp.pad(o, (0, _LANE - rem))
    rows = s.shape[0] // _LANE
    s2 = s.reshape(rows, _LANE)               # free reshape (no copy)
    o2 = o.reshape(rows, _LANE)

    br = int(block_rows)
    if br < rows:
        br = max(32, (br // 32) * 32)         # keep int8/bf16/f32 tiling legal
    br = min(br, rows)                        # single full-array block if small
    num_tiles = pl.cdiv(rows, br)

    kernel = functools.partial(
        _bin_ths_kernel,
        pos_ths=float(overlap_pos_ths),
        neg_ths=float(overlap_neg_ths),
        enable_sigmoid=bool(enable_sigmoid),
        n=int(n),
        block_rows=int(br),
        padded_total=int(num_tiles * br * _LANE),
    )

    tile = pl.BlockSpec((br, _LANE), lambda i: (i, 0))
    part = pl.BlockSpec((1, 1, _LANE), lambda i: (i, 0, 0))

    out_shapes = (
        jax.ShapeDtypeStruct((rows, _LANE), scores.dtype),         # probs
        jax.ShapeDtypeStruct((rows, _LANE), jnp.int8),             # labels
        jax.ShapeDtypeStruct((rows, _LANE), jnp.int8),             # mask
        jax.ShapeDtypeStruct((num_tiles, 1, _LANE), jnp.float32),  # partial sums
        jax.ShapeDtypeStruct((num_tiles, 1, _LANE), jnp.float32),  # partial cnts
    )

    probs2, labels2, mask2, psum, pcnt = pl.pallas_call(
        kernel,
        out_shape=out_shapes,
        grid=(num_tiles,),
        in_specs=[tile, tile],
        out_specs=(tile, tile, tile, part, part),
        compiler_params=pltpu.CompilerParams(
            dimension_semantics=("parallel",)),
    )(s2, o2)

    # Tiny finalize in XLA (keeps the grid axis 'parallel' -> both TCs on v7x).
    # NB: like BCEWithLogitsLoss on an empty selection, 0/0 -> NaN.
    loss = jnp.sum(psum) / jnp.sum(pcnt)

    probs = probs2.reshape(-1)[:n]            # no-op slices when n % 128 == 0
    labels = labels2.reshape(-1)[:n]
    mask = mask2.reshape(-1)[:n]
    return loss, probs, labels, mask


def bin_ths_overlap_loss_forward(scores, overlap, **kwargs):
    """Full module semantics: (loss, stats)."""
    loss, probs, labels, mask = bin_ths_overlap_loss(scores, overlap, **kwargs)
    jax.block_until_ready((loss, probs, labels, mask))
    # TODO(synk): boolean-mask gather (scores[mask]) is dynamically shaped and
    # has no static-shape Pallas equivalent; masked stat views built host-side.
    probs_np = np.asarray(probs)
    labels_np = np.asarray(labels)
    mask_np = np.asarray(mask).astype(bool)
    stats = {
        'MaskedLabels': labels_np[mask_np] == 0,
        'MaskedProbs': 1.0 - probs_np[mask_np],
        'Probs': probs_np,
    }
    return loss, stats


def _reference(scores, overlap, pos_ths=0.5, neg_ths=0.0):
    s = scores.reshape(-1)
    o = overlap.reshape(-1)
    labels = jnp.where(o > pos_ths, 1.0, 0.0)
    mask = (o > pos_ths) | (o <= neg_ths)
    bce = jnp.maximum(s, 0.0) - s * labels + jnp.log1p(jnp.exp(-jnp.abs(s)))
    loss = jnp.sum(jnp.where(mask, bce, 0.0)) / jnp.sum(mask)
    return loss, jax.nn.sigmoid(s), labels, mask


if __name__ == "__main__":
    key = jax.random.PRNGKey(0)
    k1, k2, k3, k4 = jax.random.split(key, 4)

    # Case 1: small module-like shapes, n = 2048 (single tile, no ragged tail).
    scores = jax.random.normal(k1, (2, 4, 16, 16), dtype=jnp.float32)
    overlap = jax.random.uniform(k2, (2, 4, 16, 16), dtype=jnp.float32)

    loss, stats = bin_ths_overlap_loss_forward(scores, overlap)
    jax.block_until_ready(loss)

    loss_r, probs_r, labels_r, mask_r = _reference(scores, overlap)
    mask_np = np.asarray(mask_r)
    assert np.allclose(float(loss), float(loss_r), rtol=1e-5, atol=1e-5)
    assert np.allclose(stats['Probs'], np.asarray(probs_r), rtol=1e-5, atol=1e-6)
    assert np.array_equal(stats['MaskedLabels'],
                          np.asarray(labels_r)[mask_np] == 0)
    assert np.allclose(stats['MaskedProbs'],
                       1.0 - np.asarray(probs_r)[mask_np], rtol=1e-5, atol=1e-6)

    # Case 2: ragged flat length (n % 128 != 0) + multiple / partial row tiles.
    scores2 = jax.random.normal(k3, (3, 5, 37, 19), dtype=jnp.float32)
    overlap2 = jax.random.uniform(k4, (3, 5, 37, 19), dtype=jnp.float32)
    loss2, probs2, labels2, mask2 = bin_ths_overlap_loss(
        scores2, overlap2, block_rows=32)
    jax.block_until_ready(loss2)

    loss2_r, probs2_r, labels2_r, mask2_r = _reference(scores2, overlap2)
    assert np.allclose(float(loss2), float(loss2_r), rtol=1e-4, atol=1e-5)
    assert np.allclose(np.asarray(probs2), np.asarray(probs2_r),
                       rtol=1e-5, atol=1e-6)
    assert np.array_equal(np.asarray(mask2).astype(bool), np.asarray(mask2_r))
    assert np.array_equal(np.asarray(labels2),
                          np.asarray(labels2_r).astype(np.int8))

    print("KERNEL_OK")
</pallas_src>

<mosaic_0001>
module attributes {stable_mosaic.version = 11 : i64} {
  func.func @_bin_ths_kernel(%arg0: i32, %arg1: memref<16x128xf32, #tpu.memory_space<vmem>>, %arg2: memref<16x128xf32, #tpu.memory_space<vmem>>, %arg3: memref<16x128xf32, #tpu.memory_space<vmem>>, %arg4: memref<16x128xi8, #tpu.memory_space<vmem>>, %arg5: memref<16x128xi8, #tpu.memory_space<vmem>>, %arg6: memref<1x1x128xf32, #tpu.memory_space<vmem>>, %arg7: memref<1x1x128xf32, #tpu.memory_space<vmem>>) attributes {dimension_semantics = [#tpu.dimension_semantics<parallel>], iteration_bounds = array<i64: 1>, scalar_prefetch = 0 : i64, scratch_operands = 0 : i64, tpu.core_type = #tpu.core_type<tc>, window_params = [{transform_indices = @transform_0, window_bounds = array<i64: 16, 128>}, {transform_indices = @transform_1, window_bounds = array<i64: 16, 128>}, {transform_indices = @transform_2, window_bounds = array<i64: 16, 128>}, {transform_indices = @transform_3, window_bounds = array<i64: 16, 128>}, {transform_indices = @transform_4, window_bounds = array<i64: 16, 128>}, {transform_indices = @transform_5, window_bounds = array<i64: 1, 1, 128>}, {transform_indices = @transform_6, window_bounds = array<i64: 1, 1, 128>}]} {
    %c0 = arith.constant 0 : index
    %c0_0 = arith.constant 0 : index
    %0 = vector.load %arg1[%c0, %c0_0] : memref<16x128xf32, #tpu.memory_space<vmem>>, vector<16x128xf32>
    %c0_1 = arith.constant 0 : index
    %c0_2 = arith.constant 0 : index
    %1 = vector.load %arg2[%c0_1, %c0_2] : memref<16x128xf32, #tpu.memory_space<vmem>>, vector<16x128xf32>
    %cst = arith.constant 5.000000e-01 : f32
    %2 = vector.broadcast %cst : f32 to vector<16x128xf32>
    %3 = arith.cmpf ogt, %1, %2 : vector<16x128xf32>
    %cst_3 = arith.constant 1.000000e+00 : f32
    %cst_4 = arith.constant 0.000000e+00 : f32
    %4 = vector.broadcast %cst_3 : f32 to vector<16x128xf32>
    %5 = vector.broadcast %cst_4 : f32 to vector<16x128xf32>
    %6 = arith.select %3, %4, %5 : vector<16x128xi1>, vector<16x128xf32>
    %cst_5 = arith.constant 0.000000e+00 : f32
    %7 = vector.broadcast %cst_5 : f32 to vector<16x128xf32>
    %8 = arith.cmpf ole, %1, %7 : vector<16x128xf32>
    %9 = arith.ori %3, %8 : vector<16x128xi1>
    %10 = math.absf %0 : vector<16x128xf32>
    %cst_6 = arith.constant 0.000000e+00 : f32
    %11 = vector.broadcast %cst_6 : f32 to vector<16x128xf32>
    %12 = arith.subf %11, %10 : vector<16x128xf32>
    %13 = math.exp %12 : vector<16x128xf32>
    %cst_7 = arith.constant 0.000000e+00 : f32
    %14 = vector.broadcast %cst_7 : f32 to vector<16x128xf32>
    %15 = arith.maximumf %0, %14 : vector<16x128xf32>
    %16 = arith.mulf %0, %6 : vector<16x128xf32>
    %17 = arith.subf %15, %16 : vector<16x128xf32>
    %18 = math.log1p %13 : vector<16x128xf32>
    %19 = arith.addf %17, %18 : vector<16x128xf32>
    %cst_8 = arith.constant 1.000000e+00 : f32
    %cst_9 = arith.constant 0.000000e+00 : f32
    %20 = vector.broadcast %cst_8 : f32 to vector<16x128xf32>
    %21 = vector.broadcast %cst_9 : f32 to vector<16x128xf32>
    %22 = arith.select %9, %20, %21 : vector<16x128xi1>, vector<16x128xf32>
    %cst_10 = arith.constant 0.000000e+00 : f32
    %23 = vector.broadcast %cst_10 : f32 to vector<16x128xf32>
    %24 = arith.select %9, %19, %23 : vector<16x128xi1>, vector<16x128xf32>
    %cst_11 = arith.constant dense<0.000000e+00> : vector<128xf32>
    %25 = vector.multi_reduction <add>, %24, %cst_11 [0] : vector<16x128xf32> to vector<128xf32>
    %26 = vector.shape_cast %25 : vector<128xf32> to vector<1x128xf32>
    %27 = vector.shape_cast %26 : vector<1x128xf32> to vector<1x1x128xf32>
    %c0_12 = arith.constant 0 : index
    %c0_13 = arith.constant 0 : index
    %c0_14 = arith.constant 0 : index
    %28 = vector.load %arg6[%c0_12, %c0_13, %c0_14] : memref<1x1x128xf32, #tpu.memory_space<vmem>>, vector<1x1x128xf32>
    tpu.vector_store %arg6[%c0_12, %c0_13, %c0_14], %27 {strides = array<i32>} : memref<1x1x128xf32, #tpu.memory_space<vmem>>, vector<1x1x128xf32>,
    %cst_15 = arith.constant dense<0.000000e+00> : vector<128xf32>
    %29 = vector.multi_reduction <add>, %22, %cst_15 [0] : vector<16x128xf32> to vector<128xf32>
    %30 = vector.shape_cast %29 : vector<128xf32> to vector<1x128xf32>
    %31 = vector.shape_cast %30 : vector<1x128xf32> to vector<1x1x128xf32>
    %c0_16 = arith.constant 0 : index
    %c0_17 = arith.constant 0 : index
    %c0_18 = arith.constant 0 : index
    %32 = vector.load %arg7[%c0_16, %c0_17, %c0_18] : memref<1x1x128xf32, #tpu.memory_space<vmem>>, vector<1x1x128xf32>
    tpu.vector_store %arg7[%c0_16, %c0_17, %c0_18], %31 {strides = array<i32>} : memref<1x1x128xf32, #tpu.memory_space<vmem>>, vector<1x1x128xf32>,
    %cst_19 = arith.constant 0.000000e+00 : f32
    %33 = vector.broadcast %cst_19 : f32 to vector<16x128xf32>
    %34 = arith.cmpf oge, %0, %33 : vector<16x128xf32>
    %cst_20 = arith.constant 1.000000e+00 : f32
    %35 = vector.broadcast %cst_20 : f32 to vector<16x128xf32>
    %36 = arith.select %34, %35, %13 : vector<16x128xi1>, vector<16x128xf32>
    %cst_21 = arith.constant 1.000000e+00 : f32
    %37 = vector.broadcast %cst_21 : f32 to vector<16x128xf32>
    %38 = arith.addf %37, %13 : vector<16x128xf32>
    %39 = tpu.reciprocal %38 : vector<16x128xf32> -> vector<16x128xf32>
    %40 = arith.mulf %36, %39 : vector<16x128xf32>
    %c0_22 = arith.constant 0 : index
    %c0_23 = arith.constant 0 : index
    %41 = vector.load %arg3[%c0_22, %c0_23] : memref<16x128xf32, #tpu.memory_space<vmem>>, vector<16x128xf32>
    tpu.vector_store %arg3[%c0_22, %c0_23], %40 {strides = array<i32>} : memref<16x128xf32, #tpu.memory_space<vmem>>, vector<16x128xf32>,
    %42 = arith.fptosi %6 : vector<16x128xf32> to vector<16x128xi8>
    %c0_24 = arith.constant 0 : index
    %c0_25 = arith.constant 0 : index
    %43 = vector.load %arg4[%c0_24, %c0_25] : memref<16x128xi8, #tpu.memory_space<vmem>>, vector<16x128xi8>
    tpu.vector_store %arg4[%c0_24, %c0_25], %42 {strides = array<i32>} : memref<16x128xi8, #tpu.memory_space<vmem>>, vector<16x128xi8>,
    %44 = arith.fptosi %22 : vector<16x128xf32> to vector<16x128xi8>
    %c0_26 = arith.constant 0 : index
    %c0_27 = arith.constant 0 : index
    %45 = vector.load %arg5[%c0_26, %c0_27] : memref<16x128xi8, #tpu.memory_space<vmem>>, vector<16x128xi8>
    tpu.vector_store %arg5[%c0_26, %c0_27], %44 {strides = array<i32>} : memref<16x128xi8, #tpu.memory_space<vmem>>, vector<16x128xi8>,
    return
  }
  func.func @transform_0(%arg0: i32) -> (i32, i32) {
    %c0_i32 = arith.constant 0 : i32
    %c0_i32_0 = arith.constant 0 : i32
    return %arg0, %c0_i32 : i32, i32
  }
  func.func @transform_1(%arg0: i32) -> (i32, i32) {
    %c0_i32 = arith.constant 0 : i32
    %c0_i32_0 = arith.constant 0 : i32
    return %arg0, %c0_i32 : i32, i32
  }
  func.func @transform_2(%arg0: i32) -> (i32, i32) {
    %c0_i32 = arith.constant 0 : i32
    %c0_i32_0 = arith.constant 0 : i32
    return %arg0, %c0_i32 : i32, i32
  }
  func.func @transform_3(%arg0: i32) -> (i32, i32) {
    %c0_i32 = arith.constant 0 : i32
    %c0_i32_0 = arith.constant 0 : i32
    return %arg0, %c0_i32 : i32, i32
  }
  func.func @transform_4(%arg0: i32) -> (i32, i32) {
    %c0_i32 = arith.constant 0 : i32
    %c0_i32_0 = arith.constant 0 : i32
    return %arg0, %c0_i32 : i32, i32
  }
  func.func @transform_5(%arg0: i32) -> (i32, i32, i32) {
    %c0_i32 = arith.constant 0 : i32
    %c0_i32_0 = arith.constant 0 : i32
    %c0_i32_1 = arith.constant 0 : i32
    return %arg0, %c0_i32, %c0_i32_0 : i32, i32, i32
  }
  func.func @transform_6(%arg0: i32) -> (i32, i32, i32) {
    %c0_i32 = arith.constant 0 : i32
    %c0_i32_0 = arith.constant 0 : i32
    %c0_i32_1 = arith.constant 0 : i32
    return %arg0, %c0_i32, %c0_i32_0 : i32, i32, i32
  }
}

</mosaic_0001>

<llo_original>
// kernel: bin_ths_overlap_loss.1
$region0: #{bin_ths_overlap_loss.1}
  #allocation0 [shape = 'u32[]', space=smem, size = 0x4, offset = 0x4, fixed_abs, tag = 'smem constant byte address 0x4 - core index']
  #allocation1 [shape = 'u32[144,128]{1,0:T(1,128)}', space=vmem, size = 0x12000, scoped, tag = 'internal scratch']
  %s0 = inlined_call_operand.vmem [shape: f32[16,128], index: 0, kind: input, shape index: {}]
  %s1 = inlined_call_operand.vmem [shape: f32[16,128], index: 1, kind: input, shape index: {}]
  %s2 = inlined_call_operand.hbm [shape: f32[16,128], index: 2, kind: output, shape index: {0}]
  %s3 = inlined_call_operand.hbm [shape: s8[16,128], index: 3, kind: output, shape index: {1}]
  %s4 = inlined_call_operand.hbm [shape: s8[16,128], index: 4, kind: output, shape index: {2}]
  %s5 = inlined_call_operand.vmem [shape: f32[1,1,128], index: 5, kind: output, shape index: {3}]
  %s6 = inlined_call_operand.vmem [shape: f32[1,1,128], index: 6, kind: output, shape index: {4}]
  %7 = xla_tuple %s2, %s3, %s4, %s5, %s6
  %s8 = sld [smem:[#allocation0]]
  $region50: #{bin_ths_overlap_loss.1} parent=0
    _
  %s10 = ssub.s32 1, %s8
  %s11 = scalar_select 0, %s10, %s8
  $region1: #{bin_ths_overlap_loss.1} parent=0
    #allocation2 [shape = 'u8[8192]{0}', space=vmem, size = 0x2000, scoped, tag = 'output window, operand 0, single buffered']
    #allocation3 [shape = 's32[1]{0}', space=sflag, size = 0x4, scoped, tag = 'scoped memory for bin_ths_overlap_loss.1']
    #allocation4 [shape = 'u8[2048]{0}', space=vmem, size = 0x800, scoped, tag = 'output window, operand 1, single buffered']
    #allocation5 [shape = 's32[1]{0}', space=sflag, size = 0x4, scoped, tag = 'scoped memory for bin_ths_overlap_loss.1']
    #allocation6 [shape = 'u8[2048]{0}', space=vmem, size = 0x800, scoped, tag = 'output window, operand 2, single buffered']
    %12 = vsyncpa [#allocation3], 0
    %13 = vsyncpa [#allocation5], 0
    // Predicated region
    $region2: #{bin_ths_overlap_loss.1} parent=1 // pred_check
      _
    $region3: #{bin_ths_overlap_loss.1} parent=1 // pred_check_branch
      %15 = sbr.rel (0) target = $region5
    $region4: #{bin_ths_overlap_loss.1} parent=1 // pred_region
      _
    $region5: #{bin_ths_overlap_loss.1} parent=1 // pred_fallthru
      _
    // Predicated region
    $region6: #{bin_ths_overlap_loss.1} parent=1 // pred_check
      _
    $region7: #{bin_ths_overlap_loss.1} parent=1 // pred_check_branch
      %17 = sbr.rel (0) target = $region9
    $region8: #{bin_ths_overlap_loss.1} parent=1 // pred_region
      _
    $region9: #{bin_ths_overlap_loss.1} parent=1 // pred_fallthru
      _
    %v18 = vld [vmem:[%s0] sm:$0xff]
    %v19 = vld [vmem:[%s0 + $0x8] sm:$0xff]
    %v20 = vld [vmem:[%s1] sm:$0xff]
    %v21 = vld [vmem:[%s1 + $0x8] sm:$0xff]
    %vm22 = vcmp.gt.f32.partialorder %v20, 0.5
    %vm23 = vcmp.gt.f32.partialorder %v21, 0.5
    %v24 = vsel %vm22, 1.0, 0.0
    %v25 = vsel %vm23, 1.0, 0.0
    %vm26 = vcmp.le.f32.partialorder %v20, 0.0
    %vm27 = vcmp.le.f32.partialorder %v21, 0.0
    %vm28 = vmor %vm22, %vm26
    %vm29 = vmor %vm23, %vm27
    %v30 = vand.u32 2147483647, %v18
    %v31 = vand.u32 2147483647, %v19
    %v32 = vsub.f32 0.0, %v30
    %v33 = vsub.f32 0.0, %v31
    %v34 = vmul.f32 %v32, 1.442695
    %v35 = vpow.pop %v34
    %v36 = vmul.f32 %v33, 1.442695
    %v37 = vpow.pop %v36
    %v38 = vmax.f32 %v18, 0.0
    %v39 = vmax.f32 %v19, 0.0
    %v40 = vmul.f32 %v18, %v24
    %v41 = vmul.f32 %v19, %v25
    %v42 = vsub.f32 %v38, %v40
    %v43 = vsub.f32 %v39, %v41
    %v44 = vadd.f32 %v35, 1.0
    %v45 = vlog2.pop %v44
    %v46 = vmul.f32 %v45, 0.6931472
    %v47 = vmul.f32 -0.5, %v35
    %v48 = vadd.f32 %v47, 1.0
    %v49 = vmul.f32 %v48, %v35
    %v50 = vand.u32 2147483647, %v35
    %vm51 = vcmp.lt.f32.partialorder %v50, 0.0004427343
    %v52 = vsel %vm51, %v49, %v46
    %v53 = vadd.f32 %v37, 1.0
    %v54 = vlog2.pop %v53
    %v55 = vmul.f32 %v54, 0.6931472
    %v56 = vmul.f32 -0.5, %v37
    %v57 = vadd.f32 %v56, 1.0
    %v58 = vmul.f32 %v57, %v37
    %v59 = vand.u32 2147483647, %v37
    %vm60 = vcmp.lt.f32.partialorder %v59, 0.0004427343
    %v61 = vsel %vm60, %v58, %v55
    %v62 = vadd.f32 %v42, %v52
    %v63 = vadd.f32 %v43, %v61
    %v64 = vsel %vm28, 1.0, 0.0
    %v65 = vsel %vm29, 1.0, 0.0
    %v66 = vsel %vm28, %v62, 0.0
    %v67 = vsel %vm29, %v63, 0.0
    %v68 = vadd.f32 %v66, %v67
    %v69 = vrot.slane %v68, 4
    %v70 = vadd.f32 %v68, %v69
    %v71 = vrot.slane %v70, 2
    %v72 = vadd.f32 %v70, %v71
    %v73 = vrot.slane %v72, 1
    %v74 = vadd.f32 %v72, %v73
    %75 = vst [vmem:[%s5] sm:$0x1] %v74
    %v76 = vadd.f32 %v64, %v65
    %v77 = vrot.slane %v76, 4
    %v78 = vadd.f32 %v76, %v77
    %v79 = vrot.slane %v78, 2
    %v80 = vadd.f32 %v78, %v79
    %v81 = vrot.slane %v80, 1
    %v82 = vadd.f32 %v80, %v81
    %83 = vst [vmem:[%s6] sm:$0x1] %v82
    %vm84 = vcmp.ge.f32.partialorder %v18, 0.0
    %vm85 = vcmp.ge.f32.partialorder %v19, 0.0
    %v86 = vsel %vm84, 1.0, %v35
    %v87 = vsel %vm85, 1.0, %v37
    %v88 = vadd.f32 %v35, 1.0
    %v89 = vadd.f32 %v37, 1.0
    %v90 = vrcp.pop %v88
    %v91 = vrcp.pop %v89
    %v92 = vmul.f32 %v86, %v90
    %v93 = vmul.f32 %v87, %v91
    %94 = vst [vmem:[#allocation2] sm:$0xff] %v92
    %95 = vst [vmem:[#allocation2 + $0x8] sm:$0xff] %v93
    %v96 = vtrunc.f32 %v24
    %v97 = vtrunc.f32 %v25
    %v98 = vpack.c.f32.eXmY %v96, %v97, 312
    %v102 = vpack.c.b8 %v98, %v98
    %v104 = vunpack.c.0.s8 %v102
    %v105 = vunpack.c.1.s8 %v102
    %v106 = vpack.c.b16 %v104, %v104
    %v107 = vpack.c.b8 %v106, %v106
    %v108 = vpack.c.b16 %v105, %v105
    %v109 = vpack.c.b8 %v108, %v108
    %110 = vst [vmem:[#allocation4] sm:$0x3] %v107
    %111 = vst [vmem:[#allocation4 + $0x2] sm:$0x3] %v109
    %v112 = vtrunc.f32 %v64
    %v113 = vtrunc.f32 %v65
    %v114 = vpack.c.f32.eXmY %v112, %v113, 312
    %v118 = vpack.c.b8 %v114, %v114
    %v120 = vunpack.c.0.s8 %v118
    %v121 = vunpack.c.1.s8 %v118
    %v122 = vpack.c.b16 %v120, %v120
    %v123 = vpack.c.b8 %v122, %v122
    %v124 = vpack.c.b16 %v121, %v121
    %v125 = vpack.c.b8 %v124, %v124
    %126 = vst [vmem:[#allocation6] sm:$0x3] %v123
    %127 = vst [vmem:[#allocation6 + $0x2] sm:$0x3] %v125
    // Predicated region
    $region10: #{bin_ths_overlap_loss.1} parent=1 // pred_check
      _
    $region11: #{bin_ths_overlap_loss.1} parent=1 // pred_check_branch
      %129 = sbr.rel (0) target = $region13
    $region12: #{bin_ths_overlap_loss.1} parent=1 // pred_region
      %s131 = ssub.s32 256, 256
      %132 = vsyncadd [#allocation3], %s131
      %s133 = sshll.u32 [#allocation2], 4
      %s134 = int_to_ptr.vmem [resolvable:$true] %s133
      %139 = dma.vmem_to_hbm [thread:$0]  %s134, 256, %s2, [#allocation3], 128, 128, 8
    $region13: #{bin_ths_overlap_loss.1} parent=1 // pred_fallthru
      _
    // Predicated region
    $region14: #{bin_ths_overlap_loss.1} parent=1 // pred_check
      _
    $region15: #{bin_ths_overlap_loss.1} parent=1 // pred_check_branch
      %141 = sbr.rel (0) target = $region17
    $region16: #{bin_ths_overlap_loss.1} parent=1 // pred_region
      %s143 = ssub.s32 64, 64
      %144 = vsyncadd [#allocation5], %s143
      %s145 = sshll.u32 [#allocation4], 4
      %s146 = int_to_ptr.vmem [resolvable:$true] %s145
      %151 = dma.vmem_to_hbm [thread:$0]  %s146, 64, %s3, [#allocation5], 32, 32, 2
    $region17: #{bin_ths_overlap_loss.1} parent=1 // pred_fallthru
      _
    // Predicated region
    $region18: #{bin_ths_overlap_loss.1} parent=1 // pred_check
      _
    $region19: #{bin_ths_overlap_loss.1} parent=1 // pred_check_branch
      %153 = sbr.rel (0) target = $region21
    $region20: #{bin_ths_overlap_loss.1} parent=1 // pred_region
      %s155 = ssub.s32 64, 64
      %156 = vsyncadd [#allocation5], %s155
      %s157 = sshll.u32 [#allocation6], 4
      %s158 = int_to_ptr.vmem [resolvable:$true] %s157
      %163 = dma.vmem_to_hbm [thread:$0]  %s158, 64, %s4, [#allocation5], 32, 32, 2
    $region21: #{bin_ths_overlap_loss.1} parent=1 // pred_fallthru
      _
    // Predicated region
    $region22: #{bin_ths_overlap_loss.1} parent=1 // pred_check
      _
    $region23: #{bin_ths_overlap_loss.1} parent=1 // pred_check_branch
      %165 = sbr.rel (0) target = $region25
    $region24: #{bin_ths_overlap_loss.1} parent=1 // pred_region
      _
    $region25: #{bin_ths_overlap_loss.1} parent=1 // pred_fallthru
      _
    // Predicated region
    $region26: #{bin_ths_overlap_loss.1} parent=1 // pred_check
      _
    $region27: #{bin_ths_overlap_loss.1} parent=1 // pred_check_branch
      %167 = sbr.rel (0) target = $region29
    $region28: #{bin_ths_overlap_loss.1} parent=1 // pred_region
      _
    $region29: #{bin_ths_overlap_loss.1} parent=1 // pred_fallthru
      _
    // Predicated region
    $region30: #{bin_ths_overlap_loss.1} parent=1 // pred_check
      _
    $region31: #{bin_ths_overlap_loss.1} parent=1 // pred_check_branch
      %169 = sbr.rel (0) target = $region33
    $region32: #{bin_ths_overlap_loss.1} parent=1 // pred_region
      %170 = dma.done [#allocation3], 256
    $region33: #{bin_ths_overlap_loss.1} parent=1 // pred_fallthru
      _
    // Predicated region
    $region34: #{bin_ths_overlap_loss.1} parent=1 // pred_check
      _
    $region35: #{bin_ths_overlap_loss.1} parent=1 // pred_check_branch
      %172 = sbr.rel (0) target = $region37
    $region36: #{bin_ths_overlap_loss.1} parent=1 // pred_region
      %173 = dma.done [#allocation5], 64
    $region37: #{bin_ths_overlap_loss.1} parent=1 // pred_fallthru
      _
    // Predicated region
    $region38: #{bin_ths_overlap_loss.1} parent=1 // pred_check
      _
    $region39: #{bin_ths_overlap_loss.1} parent=1 // pred_check_branch
      %175 = sbr.rel (0) target = $region41
    $region40: #{bin_ths_overlap_loss.1} parent=1 // pred_region
      %176 = dma.done [#allocation5], 64
    $region41: #{bin_ths_overlap_loss.1} parent=1 // pred_fallthru
      _
    // Predicated region
    $region42: #{bin_ths_overlap_loss.1} parent=1 // pred_check
      _
    $region43: #{bin_ths_overlap_loss.1} parent=1 // pred_check_branch
      %178 = sbr.rel (0) target = $region45
    $region44: #{bin_ths_overlap_loss.1} parent=1 // pred_region
      _
    $region45: #{bin_ths_overlap_loss.1} parent=1 // pred_fallthru
      _
    // Predicated region
    $region46: #{bin_ths_overlap_loss.1} parent=1 // pred_check
      _
    $region47: #{bin_ths_overlap_loss.1} parent=1 // pred_check_branch
      %180 = sbr.rel (0) target = $region49
    $region48: #{bin_ths_overlap_loss.1} parent=1 // pred_region
      _
    $region49: #{bin_ths_overlap_loss.1} parent=1 // pred_fallthru
      _
    %181 = vsyncpa [#allocation3], 1
    %182 = vsyncpa [#allocation5], 1

</llo_original>
